<compile_context>
chip_gen: v6e
topology: v6e:2x2x1
jax: 0.10.0
libtpu: 0.0.40
codegen_flags: <defaults>
</compile_context>

<pallas_src>
import functools

import jax
import jax.numpy as jnp
from jax import lax
from jax.experimental import pallas as pl
from jax.experimental.pallas import tpu as pltpu

_INV_SQRT2 = 0.7071067811865476
_LN_EPS = 1e-12
_LANES = 128
_SUBLANES = 8


def _round_up(x, m):
    return ((x + m - 1) // m) * m


def _classifier_kernel(x_ref, w1_ref, params_ref, w2_ref, o_ref, acc_ref, *,
                       d_mid, n_pad):
    k = pl.program_id(1)

    # ---- init f32 accumulator at the first K step ----
    @pl.when(k == 0)
    def _():
        acc_ref[...] = jnp.zeros_like(acc_ref)

    # ---- Linear 1 partial product on the MXU: bf16 operands, f32 accum ----
    acc_ref[...] += jnp.dot(x_ref[...], w1_ref[...],
                            preferred_element_type=jnp.float32)

    # ---- finalize: bias + GELU + LayerNorm + Linear 2 + store ----
    @pl.when(k == pl.num_programs(1) - 1)
    def _():
        # Packed tiny params: row 0 = b1, 1 = gamma, 2 = beta, 3 = b2
        # (lane-padded with zeros).
        b1 = params_ref[0:1, 0:d_mid]
        gamma = params_ref[1:2, 0:d_mid]
        beta = params_ref[2:3, 0:d_mid]
        b2 = params_ref[3:4, 0:n_pad]

        h = acc_ref[...] + b1

        # GELU (exact erf, matches the module's BERT GELU); f32 VPU/EUP math.
        h = 0.5 * h * (1.0 + lax.erf(h * _INV_SQRT2))

        # FusedLayerNorm over the feature dim (biased var, eps inside rsqrt).
        mean = jnp.mean(h, axis=-1, keepdims=True)
        centered = h - mean
        var = jnp.mean(centered * centered, axis=-1, keepdims=True)
        h = centered * lax.rsqrt(var + _LN_EPS)
        h = h * gamma + beta

        # Linear 2: bf16 x bf16 -> f32 on the MXU; padded class cols stay 0.
        out = jnp.dot(h.astype(jnp.bfloat16), w2_ref[...],
                      preferred_element_type=jnp.float32) + b2
        o_ref[...] = out.astype(o_ref.dtype)


def prepare_classifier_params(w1, b1, gamma, beta, w2, b2):
    """One-time (parameter-load time) preprocessing of the weights.

    w1: (d_in, d_mid), w2: (d_mid, num_classes); biases / LN params 1-D.
    Returns a dict of device arrays + static metadata consumed by
    classifier_forward. Do NOT call this per forward pass.
    """
    d_in, d_mid = w1.shape
    d_mid_w2, num_classes = w2.shape
    assert d_mid_w2 == d_mid

    # Lane-dense output: pad class dim up to a multiple of 128.
    n_pad = _round_up(max(num_classes, 1), _LANES)
    # Packed params buffer must hold both d_mid-length and n_pad-length rows.
    lanes_p = max(_round_up(d_mid, _LANES), n_pad)

    # bf16 for the dominant HBM bytes (w1); MXU accumulates in f32.
    w1_b = w1.astype(jnp.bfloat16)

    # One lane-aligned (4, lanes_p) f32 buffer for all tiny vectors
    # (1 DMA / 1 VMEM tile instead of four padded operands).
    params = jnp.zeros((4, lanes_p), jnp.float32)
    params = params.at[0, :d_mid].set(b1.reshape(-1).astype(jnp.float32))
    params = params.at[1, :d_mid].set(gamma.reshape(-1).astype(jnp.float32))
    params = params.at[2, :d_mid].set(beta.reshape(-1).astype(jnp.float32))
    params = params.at[3, :num_classes].set(b2.reshape(-1).astype(jnp.float32))

    # Zero-padded bf16 w2 so padded output columns are exactly zero.
    w2_p = jnp.zeros((d_mid, n_pad), jnp.bfloat16).at[:, :num_classes].set(
        w2.astype(jnp.bfloat16))

    return {
        "w1": w1_b, "params": params, "w2": w2_p,
        "d_in": int(d_in), "d_mid": int(d_mid),
        "num_classes": int(num_classes), "n_pad": int(n_pad),
        "lanes_p": int(lanes_p),
    }


def _pick_tk(d_in, target):
    """Largest multiple-of-128 divisor of d_in that is <= target."""
    if d_in % _LANES != 0:
        return d_in                      # single K tile; block == full dim
    m = d_in // _LANES
    t_max = max(1, min(m, target // _LANES))
    for t in range(t_max, 0, -1):
        if m % t == 0:
            return t * _LANES
    return d_in


def classifier_forward(x, prepared, *, max_block_b=256, tk_target=2048):
    """x: (B, 6*6*hidden*2) float; prepared: output of prepare_classifier_params."""
    B, d_in = x.shape
    assert d_in == prepared["d_in"]
    d_mid = prepared["d_mid"]
    num_classes = prepared["num_classes"]
    n_pad = prepared["n_pad"]
    lanes_p = prepared["lanes_p"]
    w1_b, params, w2_p = prepared["w1"], prepared["params"], prepared["w2"]

    # ---- batch tiling: avoid padding x whenever possible ----
    if B <= max_block_b:
        block_b = B                       # block == full array dim -> no pad
        grid_b = 1
        b_pad = B
    else:
        block_b = _round_up(max_block_b, _SUBLANES)
        grid_b = pl.cdiv(B, block_b)
        b_pad = grid_b * block_b

    # ---- K tiling over d_in (K last in grid; accumulator in VMEM) ----
    tk = _pick_tk(d_in, tk_target)
    grid_k = d_in // tk
    grid = (grid_b, grid_k)

    # Per-call activation cast (the only per-call preprocessing); pad batch
    # only when B does not fit a whole number of tiles.
    x_b = x.astype(jnp.bfloat16)
    if b_pad != B:
        x_b = jnp.zeros((b_pad, d_in), jnp.bfloat16).at[:B].set(x_b)

    # ---- VMEM budget (sized for v7x's 64 MiB; explicit limit) ----
    x_tile = block_b * tk * 2
    w1_tile = tk * d_mid * 2
    out_tile = block_b * n_pad * 4
    w2_bytes = d_mid * n_pad * 2
    params_bytes = 4 * lanes_p * 4
    acc_bytes = block_b * d_mid * 4
    needed = (2 * (x_tile + w1_tile + out_tile + w2_bytes + params_bytes)
              + acc_bytes)
    vmem_limit = int(min(max(2 * needed, 16 << 20), 64 << 20))

    # Megacore batch sharding only pays off when per-core x traffic is at
    # least the (duplicated) w1 stream: roughly B >= 2*d_mid.
    batch_sem = "parallel" if (grid_b > 1 and B >= 2 * d_mid) else "arbitrary"

    cost = pl.CostEstimate(
        flops=int(2 * b_pad * d_in * d_mid + 2 * b_pad * d_mid * n_pad),
        transcendentals=int(b_pad * d_mid),          # erf
        bytes_accessed=int(b_pad * d_in * 2 + d_in * d_mid * 2
                           + d_mid * n_pad * 2 + 4 * lanes_p * 4
                           + b_pad * n_pad * 4),
    )

    kernel = functools.partial(_classifier_kernel, d_mid=d_mid, n_pad=n_pad)

    out = pl.pallas_call(
        kernel,
        out_shape=jax.ShapeDtypeStruct((b_pad, n_pad), jnp.float32),
        grid=grid,
        in_specs=[
            pl.BlockSpec((block_b, tk), lambda i, k: (i, k)),    # x tile
            pl.BlockSpec((tk, d_mid), lambda i, k: (k, 0)),      # w1 K tile
            pl.BlockSpec((4, lanes_p), lambda i, k: (0, 0)),     # packed params
            pl.BlockSpec((d_mid, n_pad), lambda i, k: (0, 0)),   # w2 (padded)
        ],
        out_specs=pl.BlockSpec((block_b, n_pad), lambda i, k: (i, 0)),
        scratch_shapes=[pltpu.VMEM((block_b, d_mid), jnp.float32)],
        compiler_params=pltpu.CompilerParams(
            dimension_semantics=(batch_sem, "arbitrary"),
            vmem_limit_bytes=vmem_limit),
        cost_estimate=cost,
    )(x_b, w1_b, params, w2_p)

    return out[:B, :num_classes]


def _reference(x, w1, b1, gamma, beta, w2, b2):
    # Pure-JAX reference mirroring the kernel's bf16 MXU inputs; everything
    # between / after the matmuls is f32, like the kernel.
    xb = x.astype(jnp.bfloat16)
    w1b = w1.astype(jnp.bfloat16)
    h = jnp.dot(xb, w1b, preferred_element_type=jnp.float32) + b1[None, :]
    h = 0.5 * h * (1.0 + lax.erf(h * _INV_SQRT2))
    mu = jnp.mean(h, axis=-1, keepdims=True)
    var = jnp.mean((h - mu) ** 2, axis=-1, keepdims=True)
    h = (h - mu) * lax.rsqrt(var + _LN_EPS) * gamma[None, :] + beta[None, :]
    out = jnp.dot(h.astype(jnp.bfloat16), w2.astype(jnp.bfloat16),
                  preferred_element_type=jnp.float32) + b2[None, :]
    return out


if __name__ == "__main__":
    # Small config consistent with the module's shape logic.
    hidden_size = 16
    num_classes = 8
    batch = 2

    d_in = int(6 * 6 * hidden_size * 2)    # 1152
    d_mid = hidden_size * 2                 # 32

    key = jax.random.PRNGKey(0)
    k_x, k_w1, k_b1, k_w2, k_b2, k_x2 = jax.random.split(key, 6)

    # Deterministic synthetic parameters (no checkpoint load).
    x = jax.random.normal(k_x, (batch, d_in), dtype=jnp.float32)
    w1 = jax.random.normal(k_w1, (d_in, d_mid), dtype=jnp.float32) * 0.02
    b1 = jax.random.normal(k_b1, (d_mid,), dtype=jnp.float32) * 0.02
    gamma = jnp.ones((d_mid,), dtype=jnp.float32)    # FusedLayerNorm weight init
    beta = jnp.zeros((d_mid,), dtype=jnp.float32)    # FusedLayerNorm bias init
    w2 = jax.random.normal(k_w2, (d_mid, num_classes), dtype=jnp.float32) * 0.02
    b2 = jax.random.normal(k_b2, (num_classes,), dtype=jnp.float32) * 0.02

    # One-time weight preprocessing (hoisted out of the forward path).
    prepared = prepare_classifier_params(w1, b1, gamma, beta, w2, b2)

    # --- Test 1: toy batch, single batch tile, single K tile ---
    out = classifier_forward(x, prepared)
    out = jax.block_until_ready(out)
    ref = _reference(x, w1, b1, gamma, beta, w2, b2)
    assert out.shape == (batch, num_classes)
    assert jnp.allclose(out, ref, atol=1e-3, rtol=1e-3), (
        f"max abs err = {jnp.max(jnp.abs(out - ref))}")

    # --- Test 2: exercise multi batch-tile grid + K-reduction accumulator ---
    batch2 = 20
    x2 = jax.random.normal(k_x2, (batch2, d_in), dtype=jnp.float32)
    out2 = classifier_forward(x2, prepared, max_block_b=8, tk_target=128)
    out2 = jax.block_until_ready(out2)
    ref2 = _reference(x2, w1, b1, gamma, beta, w2, b2)
    assert out2.shape == (batch2, num_classes)
    assert jnp.allclose(out2, ref2, atol=1e-3, rtol=1e-3), (
        f"max abs err = {jnp.max(jnp.abs(out2 - ref2))}")

    print("KERNEL_OK")
</pallas_src>

<mosaic_0001>
module attributes {stable_mosaic.version = 11 : i64} {
  func.func @_classifier_kernel(%arg0: i32, %arg1: i32, %arg2: memref<2x1152xbf16, #tpu.memory_space<vmem>>, %arg3: memref<1152x32xbf16, #tpu.memory_space<vmem>>, %arg4: memref<4x128xf32, #tpu.memory_space<vmem>>, %arg5: memref<32x128xbf16, #tpu.memory_space<vmem>>, %arg6: memref<2x128xf32, #tpu.memory_space<vmem>>, %arg7: memref<2x32xf32, #tpu.memory_space<vmem>>) attributes {dimension_semantics = [#tpu.dimension_semantics<arbitrary>, #tpu.dimension_semantics<arbitrary>], iteration_bounds = array<i64: 1, 1>, scalar_prefetch = 0 : i64, scratch_operands = 1 : i64, tpu.core_type = #tpu.core_type<tc>, window_params = [{transform_indices = @transform_0, window_bounds = array<i64: 2, 1152>}, {transform_indices = @transform_1, window_bounds = array<i64: 1152, 32>}, {pipeline_mode = #tpu.pipeline_mode<synchronous>, transform_indices = @transform_2, window_bounds = array<i64: 4, 128>}, {pipeline_mode = #tpu.pipeline_mode<synchronous>, transform_indices = @transform_3, window_bounds = array<i64: 32, 128>}, {transform_indices = @transform_4, window_bounds = array<i64: 2, 128>}]} {
    %c0_i32 = arith.constant 0 : i32
    %0 = arith.cmpi eq, %arg1, %c0_i32 : i32
    %1 = arith.extui %0 : i1 to i32
    %c0_i32_0 = arith.constant 0 : i32
    %2 = arith.cmpi ne, %1, %c0_i32_0 : i32
    scf.if %2 {
      %cst_10 = arith.constant 0.000000e+00 : f32
      %12 = vector.broadcast %cst_10 : f32 to vector<2x32xf32>
      %c0_11 = arith.constant 0 : index
      %c0_12 = arith.constant 0 : index
      %13 = vector.load %arg7[%c0_11, %c0_12] : memref<2x32xf32, #tpu.memory_space<vmem>>, vector<2x32xf32>
      tpu.vector_store %arg7[%c0_11, %c0_12], %12 {strides = array<i32>} : memref<2x32xf32, #tpu.memory_space<vmem>>, vector<2x32xf32>,
    } else {
    }
    %c0 = arith.constant 0 : index
    %c0_1 = arith.constant 0 : index
    %3 = vector.load %arg7[%c0, %c0_1] : memref<2x32xf32, #tpu.memory_space<vmem>>, vector<2x32xf32>
    %c0_2 = arith.constant 0 : index
    %c0_3 = arith.constant 0 : index
    %4 = vector.load %arg2[%c0_2, %c0_3] : memref<2x1152xbf16, #tpu.memory_space<vmem>>, vector<2x1152xbf16>
    %c0_4 = arith.constant 0 : index
    %c0_5 = arith.constant 0 : index
    %5 = vector.load %arg3[%c0_4, %c0_5] : memref<1152x32xbf16, #tpu.memory_space<vmem>>, vector<1152x32xbf16>
    %cst = arith.constant dense<0.000000e+00> : vector<2x32xf32>
    %6 = tpu.matmul %4, %5, %cst {dimension_numbers = #tpu.dot_dimension_numbers<[1], [0], [0], [1], [0, 0, 1, 1], [], []>} : vector<2x1152xbf16>, vector<1152x32xbf16>, vector<2x32xf32> -> vector<2x32xf32>
    %7 = arith.addf %3, %6 : vector<2x32xf32>
    %c0_6 = arith.constant 0 : index
    %c0_7 = arith.constant 0 : index
    %8 = vector.load %arg7[%c0_6, %c0_7] : memref<2x32xf32, #tpu.memory_space<vmem>>, vector<2x32xf32>
    tpu.vector_store %arg7[%c0_6, %c0_7], %7 {strides = array<i32>} : memref<2x32xf32, #tpu.memory_space<vmem>>, vector<2x32xf32>,
    %c0_i32_8 = arith.constant 0 : i32
    %9 = arith.cmpi eq, %arg1, %c0_i32_8 : i32
    %10 = arith.extui %9 : i1 to i32
    %c0_i32_9 = arith.constant 0 : i32
    %11 = arith.cmpi ne, %10, %c0_i32_9 : i32
    scf.if %11 {
      %c0_10 = arith.constant 0 : index
      %c0_11 = arith.constant 0 : index
      %12 = vector.load %arg4[%c0_10, %c0_11] : memref<4x128xf32, #tpu.memory_space<vmem>>, vector<1x32xf32>
      %c1 = arith.constant 1 : index
      %c0_12 = arith.constant 0 : index
      %13 = vector.load %arg4[%c1, %c0_12] : memref<4x128xf32, #tpu.memory_space<vmem>>, vector<1x32xf32>
      %c2 = arith.constant 2 : index
      %c0_13 = arith.constant 0 : index
      %14 = vector.load %arg4[%c2, %c0_13] : memref<4x128xf32, #tpu.memory_space<vmem>>, vector<1x32xf32>
      %c3 = arith.constant 3 : index
      %c0_14 = arith.constant 0 : index
      %15 = vector.load %arg4[%c3, %c0_14] : memref<4x128xf32, #tpu.memory_space<vmem>>, vector<1x128xf32>
      %c0_15 = arith.constant 0 : index
      %c0_16 = arith.constant 0 : index
      %16 = vector.load %arg7[%c0_15, %c0_16] : memref<2x32xf32, #tpu.memory_space<vmem>>, vector<2x32xf32>
      %17 = vector.broadcast %12 : vector<1x32xf32> to vector<2x32xf32>
      %18 = arith.addf %16, %17 : vector<2x32xf32>
      %cst_17 = arith.constant 5.000000e-01 : f32
      %19 = vector.broadcast %cst_17 : f32 to vector<2x32xf32>
      %20 = arith.mulf %19, %18 : vector<2x32xf32>
      %cst_18 = arith.constant 0.707106769 : f32
      %21 = vector.broadcast %cst_18 : f32 to vector<2x32xf32>
      %22 = arith.mulf %18, %21 : vector<2x32xf32>
      %23 = math.erf %22 : vector<2x32xf32>
      %cst_19 = arith.constant 1.000000e+00 : f32
      %24 = vector.broadcast %cst_19 : f32 to vector<2x32xf32>
      %25 = arith.addf %24, %23 : vector<2x32xf32>
      %26 = arith.mulf %20, %25 : vector<2x32xf32>
      %cst_20 = arith.constant dense<0.000000e+00> : vector<2xf32>
      %27 = vector.multi_reduction <add>, %26, %cst_20 [1] : vector<2x32xf32> to vector<2xf32>
      %28 = vector.shape_cast %27 : vector<2xf32> to vector<2x1xf32>
      %cst_21 = arith.constant 3.200000e+01 : f32
      %29 = vector.broadcast %cst_21 : f32 to vector<2x1xf32>
      %30 = arith.divf %28, %29 : vector<2x1xf32>
      %31 = vector.broadcast %30 : vector<2x1xf32> to vector<2x32xf32>
      %32 = arith.subf %26, %31 : vector<2x32xf32>
      %33 = arith.mulf %32, %32 : vector<2x32xf32>
      %cst_22 = arith.constant dense<0.000000e+00> : vector<2xf32>
      %34 = vector.multi_reduction <add>, %33, %cst_22 [1] : vector<2x32xf32> to vector<2xf32>
      %35 = vector.shape_cast %34 : vector<2xf32> to vector<2x1xf32>
      %cst_23 = arith.constant 3.200000e+01 : f32
      %36 = vector.broadcast %cst_23 : f32 to vector<2x1xf32>
      %37 = arith.divf %35, %36 : vector<2x1xf32>
      %cst_24 = arith.constant 9.99999996E-13 : f32
      %38 = vector.broadcast %cst_24 : f32 to vector<2x1xf32>
      %39 = arith.addf %37, %38 : vector<2x1xf32>
      %40 = math.rsqrt %39 : vector<2x1xf32>
      %41 = vector.broadcast %40 : vector<2x1xf32> to vector<2x32xf32>
      %42 = arith.mulf %32, %41 : vector<2x32xf32>
      %43 = vector.broadcast %13 : vector<1x32xf32> to vector<2x32xf32>
      %44 = arith.mulf %42, %43 : vector<2x32xf32>
      %45 = vector.broadcast %14 : vector<1x32xf32> to vector<2x32xf32>
      %46 = arith.addf %44, %45 : vector<2x32xf32>
      %47 = arith.truncf %46 : vector<2x32xf32> to vector<2x32xbf16>
      %c0_25 = arith.constant 0 : index
      %c0_26 = arith.constant 0 : index
      %48 = vector.load %arg5[%c0_25, %c0_26] : memref<32x128xbf16, #tpu.memory_space<vmem>>, vector<32x128xbf16>
      %cst_27 = arith.constant dense<0.000000e+00> : vector<2x128xf32>
      %49 = tpu.matmul %47, %48, %cst_27 {dimension_numbers = #tpu.dot_dimension_numbers<[1], [0], [0], [1], [0, 0, 1, 1], [], []>} : vector<2x32xbf16>, vector<32x128xbf16>, vector<2x128xf32> -> vector<2x128xf32>
      %50 = vector.broadcast %15 : vector<1x128xf32> to vector<2x128xf32>
      %51 = arith.addf %49, %50 : vector<2x128xf32>
      %c0_28 = arith.constant 0 : index
      %c0_29 = arith.constant 0 : index
      %52 = vector.load %arg6[%c0_28, %c0_29] : memref<2x128xf32, #tpu.memory_space<vmem>>, vector<2x128xf32>
      tpu.vector_store %arg6[%c0_28, %c0_29], %51 {strides = array<i32>} : memref<2x128xf32, #tpu.memory_space<vmem>>, vector<2x128xf32>,
    } else {
    }
    return
  }
  func.func @transform_0(%arg0: i32, %arg1: i32) -> (i32, i32) {
    %c0_i32 = arith.constant 0 : i32
    return %arg0, %arg1 : i32, i32
  }
  func.func @transform_1(%arg0: i32, %arg1: i32) -> (i32, i32) {
    %c0_i32 = arith.constant 0 : i32
    %c0_i32_0 = arith.constant 0 : i32
    return %arg1, %c0_i32 : i32, i32
  }
  func.func @transform_2(%arg0: i32, %arg1: i32) -> (i32, i32) {
    %c0_i32 = arith.constant 0 : i32
    %c0_i32_0 = arith.constant 0 : i32
    %c0_i32_1 = arith.constant 0 : i32
    return %c0_i32, %c0_i32_0 : i32, i32
  }
  func.func @transform_3(%arg0: i32, %arg1: i32) -> (i32, i32) {
    %c0_i32 = arith.constant 0 : i32
    %c0_i32_0 = arith.constant 0 : i32
    %c0_i32_1 = arith.constant 0 : i32
    return %c0_i32, %c0_i32_0 : i32, i32
  }
  func.func @transform_4(%arg0: i32, %arg1: i32) -> (i32, i32) {
    %c0_i32 = arith.constant 0 : i32
    %c0_i32_0 = arith.constant 0 : i32
    return %arg0, %c0_i32 : i32, i32
  }
}

</mosaic_0001>

<llo_original>
// kernel: tpu_custom_call.1
$region0: #{tpu_custom_call.1}
  #allocation0 [shape = 'u32[]', space=smem, size = 0x4, offset = 0x4, fixed_abs, tag = 'smem constant byte address 0x4 - core index']
  #allocation1 [shape = 'u32[144,128]{1,0:T(1,128)}', space=vmem, size = 0x12000, scoped, tag = 'internal scratch']
  #allocation2 [shape = 'f32[2,32]{1,0:T(2,128)}', space=vmem, size = 0x400, scoped, tag = 'scratch operand']
  %s0 = inlined_call_operand.vmem [shape: bf16[2,1152], index: 0, kind: input, shape index: {}]
  %s1 = inlined_call_operand.vmem [shape: bf16[1152,32], index: 1, kind: input, shape index: {}]
  %s2 = inlined_call_operand.vmem [shape: f32[4,128], index: 2, kind: input, shape index: {}]
  %s3 = inlined_call_operand.vmem [shape: bf16[32,128], index: 3, kind: input, shape index: {}]
  %s4 = inlined_call_operand.hbm [shape: f32[2,128], index: 4, kind: output, shape index: {}]
  %s5 = sld [smem:[#allocation0]]
  $region34: #{tpu_custom_call.1} parent=0
    _
  %s7 = ssub.s32 1, %s5
  %s8 = scalar_select 0, %s7, %s5
  $region1: #{tpu_custom_call.1} parent=0
    #allocation3 [shape = 'u8[1024]{0}', space=vmem, size = 0x400, scoped, tag = 'output window, operand 0, single buffered']
    #allocation4 [shape = 's32[1]{0}', space=sflag, size = 0x4, scoped, tag = 'scoped memory for tpu_custom_call.1']
    %9 = vsyncpa [#allocation4], 0
    // Predicated region
    $region2: #{tpu_custom_call.1} parent=1 // pred_check
      _
    $region3: #{tpu_custom_call.1} parent=1 // pred_check_branch
      %11 = sbr.rel (0) target = $region5
    $region4: #{tpu_custom_call.1} parent=1 // pred_region
      _
    $region5: #{tpu_custom_call.1} parent=1 // pred_fallthru
      _
    // Predicated region
    $region6: #{tpu_custom_call.1} parent=1 // pred_check
      _
    $region7: #{tpu_custom_call.1} parent=1 // pred_check_branch
      %13 = sbr.rel (0) target = $region9
    $region8: #{tpu_custom_call.1} parent=1 // pred_region
      _
    $region9: #{tpu_custom_call.1} parent=1 // pred_fallthru
      _
    // Predicated region
    $region10: #{tpu_custom_call.1} parent=1 // pred_check
      _
    $region11: #{tpu_custom_call.1} parent=1 // pred_check_branch
      %15 = sbr.rel (0) target = $region13
    $region12: #{tpu_custom_call.1} parent=1 // pred_region
      _
    $region13: #{tpu_custom_call.1} parent=1 // pred_fallthru
      _
    // Predicated region
    $region14: #{tpu_custom_call.1} parent=1 // pred_check
      _
    $region15: #{tpu_custom_call.1} parent=1 // pred_check_branch
      %17 = sbr.rel (0) target = $region17
    $region16: #{tpu_custom_call.1} parent=1 // pred_region
      _
    $region17: #{tpu_custom_call.1} parent=1 // pred_fallthru
      _
    %p19 = scmp.eq.s32.totalorder 0, 0
    // Predicated region
    $region18: #{tpu_custom_call.1} parent=1 // pred_check
      %p20 = pneg %p19
    $region19: #{tpu_custom_call.1} parent=1 // pred_check_branch
      %22 = sbr.rel (%p20) target = $region21
    $region20: #{tpu_custom_call.1} parent=1 // pred_region
      %vm23 = vcmask 254976
      %24 = vst.msk [vmem:[#allocation2] sm:$0x3] %vm23, 0.0
    $region21: #{tpu_custom_call.1} parent=1 // pred_fallthru
      _
    %v25 = vld [vmem:[#allocation2] sm:$0x3]
    %v26 = vld [vmem:[%s0] sm:$0xff]
    %v27 = vld [vmem:[%s0 + $0x8] sm:$0x1]
    %v28 = vld [vmem:[%s1] sm:$0xf]
    %v29 = vld [vmem:[%s1 + $0x4] sm:$0xf]
    %v30 = vld [vmem:[%s1 + $0x8] sm:$0xf]
    %v31 = vld [vmem:[%s1 + $0xc] sm:$0xf]
    %v32 = vld [vmem:[%s1 + $0x10] sm:$0xf]
    %v33 = vld [vmem:[%s1 + $0x14] sm:$0xf]
    %v34 = vld [vmem:[%s1 + $0x18] sm:$0xf]
    %v35 = vld [vmem:[%s1 + $0x1c] sm:$0xf]
    %v36 = vld [vmem:[%s1 + $0x20] sm:$0xf]
    %v37 = vld [vmem:[%s1 + $0x24] sm:$0xf]
    %v38 = vld [vmem:[%s1 + $0x28] sm:$0xf]
    %v39 = vld [vmem:[%s1 + $0x2c] sm:$0xf]
    %v40 = vld [vmem:[%s1 + $0x30] sm:$0xf]
    %v41 = vld [vmem:[%s1 + $0x34] sm:$0xf]
    %v42 = vld [vmem:[%s1 + $0x38] sm:$0xf]
    %v43 = vld [vmem:[%s1 + $0x3c] sm:$0xf]
    %v44 = vld [vmem:[%s1 + $0x40] sm:$0xf]
    %v45 = vld [vmem:[%s1 + $0x44] sm:$0xf]
    %v46 = vld [vmem:[%s1 + $0x48] sm:$0xf]
    %v47 = vld [vmem:[%s1 + $0x4c] sm:$0xf]
    %v48 = vld [vmem:[%s1 + $0x50] sm:$0xf]
    %v49 = vld [vmem:[%s1 + $0x54] sm:$0xf]
    %v50 = vld [vmem:[%s1 + $0x58] sm:$0xf]
    %v51 = vld [vmem:[%s1 + $0x5c] sm:$0xf]
    %v52 = vld [vmem:[%s1 + $0x60] sm:$0xf]
    %v53 = vld [vmem:[%s1 + $0x64] sm:$0xf]
    %v54 = vld [vmem:[%s1 + $0x68] sm:$0xf]
    %v55 = vld [vmem:[%s1 + $0x6c] sm:$0xf]
    %v56 = vld [vmem:[%s1 + $0x70] sm:$0xf]
    %v57 = vld [vmem:[%s1 + $0x74] sm:$0xf]
    %v58 = vld [vmem:[%s1 + $0x78] sm:$0xf]
    %v59 = vld [vmem:[%s1 + $0x7c] sm:$0xf]
    %v60 = vld [vmem:[%s1 + $0x80] sm:$0xf]
    %v61 = vld [vmem:[%s1 + $0x84] sm:$0xf]
    %v62 = vld [vmem:[%s1 + $0x88] sm:$0xf]
    %v63 = vld [vmem:[%s1 + $0x8c] sm:$0xf]
    %v64 = vld [vmem:[%s1 + $0x90] sm:$0xf]
    %v65 = vld [vmem:[%s1 + $0x94] sm:$0xf]
    %v66 = vld [vmem:[%s1 + $0x98] sm:$0xf]
    %v67 = vld [vmem:[%s1 + $0x9c] sm:$0xf]
    %v68 = vld [vmem:[%s1 + $0xa0] sm:$0xf]
    %v69 = vld [vmem:[%s1 + $0xa4] sm:$0xf]
    %v70 = vld [vmem:[%s1 + $0xa8] sm:$0xf]
    %v71 = vld [vmem:[%s1 + $0xac] sm:$0xf]
    %v72 = vld [vmem:[%s1 + $0xb0] sm:$0xf]
    %v73 = vld [vmem:[%s1 + $0xb4] sm:$0xf]
    %v74 = vld [vmem:[%s1 + $0xb8] sm:$0xf]
    %v75 = vld [vmem:[%s1 + $0xbc] sm:$0xf]
    %v76 = vld [vmem:[%s1 + $0xc0] sm:$0xf]
    %v77 = vld [vmem:[%s1 + $0xc4] sm:$0xf]
    %v78 = vld [vmem:[%s1 + $0xc8] sm:$0xf]
    %v79 = vld [vmem:[%s1 + $0xcc] sm:$0xf]
    %v80 = vld [vmem:[%s1 + $0xd0] sm:$0xf]
    %v81 = vld [vmem:[%s1 + $0xd4] sm:$0xf]
    %v82 = vld [vmem:[%s1 + $0xd8] sm:$0xf]
    %v83 = vld [vmem:[%s1 + $0xdc] sm:$0xf]
    %v84 = vld [vmem:[%s1 + $0xe0] sm:$0xf]
    %v85 = vld [vmem:[%s1 + $0xe4] sm:$0xf]
    %v86 = vld [vmem:[%s1 + $0xe8] sm:$0xf]
    %v87 = vld [vmem:[%s1 + $0xec] sm:$0xf]
    %v88 = vld [vmem:[%s1 + $0xf0] sm:$0xf]
    %v89 = vld [vmem:[%s1 + $0xf4] sm:$0xf]
    %v90 = vld [vmem:[%s1 + $0xf8] sm:$0xf]
    %v91 = vld [vmem:[%s1 + $0xfc] sm:$0xf]
    %v92 = vld [vmem:[%s1 + $0x100] sm:$0xf]
    %v93 = vld [vmem:[%s1 + $0x104] sm:$0xf]
    %v94 = vld [vmem:[%s1 + $0x108] sm:$0xf]
    %v95 = vld [vmem:[%s1 + $0x10c] sm:$0xf]
    %v96 = vld [vmem:[%s1 + $0x110] sm:$0xf]
    %v97 = vld [vmem:[%s1 + $0x114] sm:$0xf]
    %v98 = vld [vmem:[%s1 + $0x118] sm:$0xf]
    %v99 = vld [vmem:[%s1 + $0x11c] sm:$0xf]
    %v100 = vld [vmem:[%s1 + $0x120] sm:$0xf]
    %v101 = vld [vmem:[%s1 + $0x124] sm:$0xf]
    %v102 = vld [vmem:[%s1 + $0x128] sm:$0xf]
    %v103 = vld [vmem:[%s1 + $0x12c] sm:$0xf]
    %v104 = vld [vmem:[%s1 + $0x130] sm:$0xf]
    %v105 = vld [vmem:[%s1 + $0x134] sm:$0xf]
    %v106 = vld [vmem:[%s1 + $0x138] sm:$0xf]
    %v107 = vld [vmem:[%s1 + $0x13c] sm:$0xf]
    %v108 = vld [vmem:[%s1 + $0x140] sm:$0xf]
    %v109 = vld [vmem:[%s1 + $0x144] sm:$0xf]
    %v110 = vld [vmem:[%s1 + $0x148] sm:$0xf]
    %v111 = vld [vmem:[%s1 + $0x14c] sm:$0xf]
    %v112 = vld [vmem:[%s1 + $0x150] sm:$0xf]
    %v113 = vld [vmem:[%s1 + $0x154] sm:$0xf]
    %v114 = vld [vmem:[%s1 + $0x158] sm:$0xf]
    %v115 = vld [vmem:[%s1 + $0x15c] sm:$0xf]
    %v116 = vld [vmem:[%s1 + $0x160] sm:$0xf]
    %v117 = vld [vmem:[%s1 + $0x164] sm:$0xf]
    %v118 = vld [vmem:[%s1 + $0x168] sm:$0xf]
    %v119 = vld [vmem:[%s1 + $0x16c] sm:$0xf]
    %v120 = vld [vmem:[%s1 + $0x170] sm:$0xf]
    %v121 = vld [vmem:[%s1 + $0x174] sm:$0xf]
    %v122 = vld [vmem:[%s1 + $0x178] sm:$0xf]
    %v123 = vld [vmem:[%s1 + $0x17c] sm:$0xf]
    %v124 = vld [vmem:[%s1 + $0x180] sm:$0xf]
    %v125 = vld [vmem:[%s1 + $0x184] sm:$0xf]
    %v126 = vld [vmem:[%s1 + $0x188] sm:$0xf]
    %v127 = vld [vmem:[%s1 + $0x18c] sm:$0xf]
    %v128 = vld [vmem:[%s1 + $0x190] sm:$0xf]
    %v129 = vld [vmem:[%s1 + $0x194] sm:$0xf]
    %v130 = vld [vmem:[%s1 + $0x198] sm:$0xf]
    %v131 = vld [vmem:[%s1 + $0x19c] sm:$0xf]
    %v132 = vld [vmem:[%s1 + $0x1a0] sm:$0xf]
    %v133 = vld [vmem:[%s1 + $0x1a4] sm:$0xf]
    %v134 = vld [vmem:[%s1 + $0x1a8] sm:$0xf]
    %v135 = vld [vmem:[%s1 + $0x1ac] sm:$0xf]
    %v136 = vld [vmem:[%s1 + $0x1b0] sm:$0xf]
    %v137 = vld [vmem:[%s1 + $0x1b4] sm:$0xf]
    %v138 = vld [vmem:[%s1 + $0x1b8] sm:$0xf]
    %v139 = vld [vmem:[%s1 + $0x1bc] sm:$0xf]
    %v140 = vld [vmem:[%s1 + $0x1c0] sm:$0xf]
    %v141 = vld [vmem:[%s1 + $0x1c4] sm:$0xf]
    %v142 = vld [vmem:[%s1 + $0x1c8] sm:$0xf]
    %v143 = vld [vmem:[%s1 + $0x1cc] sm:$0xf]
    %v144 = vld [vmem:[%s1 + $0x1d0] sm:$0xf]
    %v145 = vld [vmem:[%s1 + $0x1d4] sm:$0xf]
    %v146 = vld [vmem:[%s1 + $0x1d8] sm:$0xf]
    %v147 = vld [vmem:[%s1 + $0x1dc] sm:$0xf]
    %v148 = vld [vmem:[%s1 + $0x1e0] sm:$0xf]
    %v149 = vld [vmem:[%s1 + $0x1e4] sm:$0xf]
    %v150 = vld [vmem:[%s1 + $0x1e8] sm:$0xf]
    %v151 = vld [vmem:[%s1 + $0x1ec] sm:$0xf]
    %v152 = vld [vmem:[%s1 + $0x1f0] sm:$0xf]
    %v153 = vld [vmem:[%s1 + $0x1f4] sm:$0xf]
    %v154 = vld [vmem:[%s1 + $0x1f8] sm:$0xf]
    %v155 = vld [vmem:[%s1 + $0x1fc] sm:$0xf]
    %v156 = vld [vmem:[%s1 + $0x200] sm:$0xf]
    %v157 = vld [vmem:[%s1 + $0x204] sm:$0xf]
    %v158 = vld [vmem:[%s1 + $0x208] sm:$0xf]
    %v159 = vld [vmem:[%s1 + $0x20c] sm:$0xf]
    %v160 = vld [vmem:[%s1 + $0x210] sm:$0xf]
    %v161 = vld [vmem:[%s1 + $0x214] sm:$0xf]
    %v162 = vld [vmem:[%s1 + $0x218] sm:$0xf]
    %v163 = vld [vmem:[%s1 + $0x21c] sm:$0xf]
    %v164 = vld [vmem:[%s1 + $0x220] sm:$0xf]
    %v165 = vld [vmem:[%s1 + $0x224] sm:$0xf]
    %v166 = vld [vmem:[%s1 + $0x228] sm:$0xf]
    %v167 = vld [vmem:[%s1 + $0x22c] sm:$0xf]
    %v168 = vld [vmem:[%s1 + $0x230] sm:$0xf]
    %v169 = vld [vmem:[%s1 + $0x234] sm:$0xf]
    %v170 = vld [vmem:[%s1 + $0x238] sm:$0xf]
    %v171 = vld [vmem:[%s1 + $0x23c] sm:$0xf]
    %v174 = vcombine.high %v26, %v26
    %v176 = vunpack.c.l.s4 1966171168
    %v177 = vunpack.c.0.s8 %v176
    %v178 = vlaneseq
    %v179 = vshrl.u32 %v178, 7
    %v180 = vsub.s32 %v177, %v179
    %v181 = vrot.slane %v26, %v180
    %v183 = vunpack.c.l.s4 1966171168
    %v184 = vunpack.c.0.s8 %v183
    %v185 = vlaneseq
    %v186 = vshrl.u32 %v185, 7
    %v187 = vsub.s32 %v184, %v186
    %v188 = vrot.slane %v174, %v187
    %v189 = vcombine.high %v181, %v181
    %v190 = vcombine.high %v188, %v188
    %v192 = vunpack.c.l.s4 1966171168
    %v193 = vunpack.c.0.s8 %v192
    %v194 = vlaneseq
    %v195 = vshrl.u32 %v194, 7
    %v196 = vsub.s32 %v193, %v195
    %v197 = vrot.slane %v181, %v196
    %v199 = vunpack.c.l.s4 1966171168
    %v200 = vunpack.c.0.s8 %v199
    %v201 = vlaneseq
    %v202 = vshrl.u32 %v201, 7
    %v203 = vsub.s32 %v200, %v202
    %v204 = vrot.slane %v188, %v203
    %v206 = vunpack.c.l.s4 1966171168
    %v207 = vunpack.c.0.s8 %v206
    %v208 = vlaneseq
    %v209 = vshrl.u32 %v208, 7
    %v210 = vsub.s32 %v207, %v209
    %v211 = vrot.slane %v189, %v210
    %v213 = vunpack.c.l.s4 1966171168
    %v214 = vunpack.c.0.s8 %v213
    %v215 = vlaneseq
    %v216 = vshrl.u32 %v215, 7
    %v217 = vsub.s32 %v214, %v216
    %v218 = vrot.slane %v190, %v217
    %v219 = vcombine.high %v197, %v197
    %v220 = vcombine.high %v204, %v204
    %v221 = vcombine.high %v211, %v211
    %v222 = vcombine.high %v218, %v218
    %v224 = vunpack.c.l.s4 1966171168
    %v225 = vunpack.c.0.s8 %v224
    %v226 = vlaneseq
    %v227 = vshrl.u32 %v226, 7
    %v228 = vsub.s32 %v225, %v227
    %v229 = vrot.slane %v27, %v228
    %v231 = vunpack.c.l.s4 1966171168
    %v232 = vunpack.c.0.s8 %v231
    %v233 = vlaneseq
    %v234 = vshrl.u32 %v233, 7
    %v235 = vsub.s32 %v232, %v234
    %v236 = vrot.slane %v229, %v235
    %v390 = vunpack.c.l.b16 %v28
    %v391 = vunpack.c.l.b16 %v29
    %v392 = vunpack.c.l.b16 %v30
    %v393 = vunpack.c.l.b16 %v31
    %v394 = vunpack.c.l.b16 %v32
    %v395 = vunpack.c.l.b16 %v33
    %v396 = vunpack.c.l.b16 %v34
    %v397 = vunpack.c.l.b16 %v35
    %v398 = vunpack.c.l.b16 %v36
    %v399 = vunpack.c.l.b16 %v37
    %v400 = vunpack.c.l.b16 %v38
    %v401 = vunpack.c.l.b16 %v39
    %v402 = vunpack.c.l.b16 %v40
    %v403 = vunpack.c.l.b16 %v41
    %v404 = vunpack.c.l.b16 %v42
    %v405 = vunpack.c.l.b16 %v43
    %v406 = vunpack.c.l.b16 %v44
    %v407 = vunpack.c.l.b16 %v45
    %v408 = vunpack.c.l.b16 %v46
    %v409 = vunpack.c.l.b16 %v47
    %v410 = vunpack.c.l.b16 %v48
    %v411 = vunpack.c.l.b16 %v49
    %v412 = vunpack.c.l.b16 %v50
    %v413 = vunpack.c.l.b16 %v51
    %v414 = vunpack.c.l.b16 %v52
    %v415 = vunpack.c.l.b16 %v53
    %v416 = vunpack.c.l.b16 %v54
    %v417 = vunpack.c.l.b16 %v55
    %v418 = vunpack.c.l.b16 %v56
    %v419 = vunpack.c.l.b16 %v57
    %v420 = vunpack.c.l.b16 %v58
    %v421 = vunpack.c.l.b16 %v59
    %v422 = vunpack.c.l.b16 %v60
    %v423 = vunpack.c.l.b16 %v61
    %v424 = vunpack.c.l.b16 %v62
    %v425 = vunpack.c.l.b16 %v63
    %v426 = vunpack.c.l.b16 %v64
    %v427 = vunpack.c.l.b16 %v65
    %v428 = vunpack.c.l.b16 %v66
    %v429 = vunpack.c.l.b16 %v67
    %v430 = vunpack.c.l.b16 %v68
    %v431 = vunpack.c.l.b16 %v69
    %v432 = vunpack.c.l.b16 %v70
    %v433 = vunpack.c.l.b16 %v71
    %v434 = vunpack.c.l.b16 %v72
    %v435 = vunpack.c.l.b16 %v73
    %v436 = vunpack.c.l.b16 %v74
    %v437 = vunpack.c.l.b16 %v75
    %v438 = vunpack.c.l.b16 %v76
    %v439 = vunpack.c.l.b16 %v77
    %v440 = vunpack.c.l.b16 %v78
    %v441 = vunpack.c.l.b16 %v79
    %v442 = vunpack.c.l.b16 %v80
    %v443 = vunpack.c.l.b16 %v81
    %v444 = vunpack.c.l.b16 %v82
    %v445 = vunpack.c.l.b16 %v83
    %v446 = vunpack.c.l.b16 %v84
    %v447 = vunpack.c.l.b16 %v85
    %v448 = vunpack.c.l.b16 %v86
    %v449 = vunpack.c.l.b16 %v87
    %v450 = vunpack.c.l.b16 %v88
    %v451 = vunpack.c.l.b16 %v89
    %v452 = vunpack.c.l.b16 %v90
    %v453 = vunpack.c.l.b16 %v91
    %v454 = vunpack.c.l.b16 %v92
    %v455 = vunpack.c.l.b16 %v93
    %v456 = vunpack.c.l.b16 %v94
    %v457 = vunpack.c.l.b16 %v95
    %v458 = vunpack.c.l.b16 %v96
    %v459 = vunpack.c.l.b16 %v97
    %v460 = vunpack.c.l.b16 %v98
    %v461 = vunpack.c.l.b16 %v99
    %v462 = vunpack.c.l.b16 %v100
    %v463 = vunpack.c.l.b16 %v101
    %v464 = vunpack.c.l.b16 %v102
    %v465 = vunpack.c.l.b16 %v103
    %v466 = vunpack.c.l.b16 %v104
    %v467 = vunpack.c.l.b16 %v105
    %v468 = vunpack.c.l.b16 %v106
    %v469 = vunpack.c.l.b16 %v107
    %v470 = vunpack.c.l.b16 %v108
    %v471 = vunpack.c.l.b16 %v109
    %v472 = vunpack.c.l.b16 %v110
    %v473 = vunpack.c.l.b16 %v111
    %v474 = vunpack.c.l.b16 %v112
    %v475 = vunpack.c.l.b16 %v113
    %v476 = vunpack.c.l.b16 %v114
    %v477 = vunpack.c.l.b16 %v115
    %v478 = vunpack.c.l.b16 %v116
    %v479 = vunpack.c.l.b16 %v117
    %v480 = vunpack.c.l.b16 %v118
    %v481 = vunpack.c.l.b16 %v119
    %v482 = vunpack.c.l.b16 %v120
    %v483 = vunpack.c.l.b16 %v121
    %v484 = vunpack.c.l.b16 %v122
    %v485 = vunpack.c.l.b16 %v123
    %v486 = vunpack.c.l.b16 %v124
    %v487 = vunpack.c.l.b16 %v125
    %v488 = vunpack.c.l.b16 %v126
    %v489 = vunpack.c.l.b16 %v127
    %v490 = vunpack.c.l.b16 %v128
    %v491 = vunpack.c.l.b16 %v129
    %v492 = vunpack.c.l.b16 %v130
    %v493 = vunpack.c.l.b16 %v131
    %v494 = vunpack.c.l.b16 %v132
    %v495 = vunpack.c.l.b16 %v133
    %v496 = vunpack.c.l.b16 %v134
    %v497 = vunpack.c.l.b16 %v135
    %v498 = vunpack.c.l.b16 %v136
    %v499 = vunpack.c.l.b16 %v137
    %v500 = vunpack.c.l.b16 %v138
    %v501 = vunpack.c.l.b16 %v139
    %v502 = vunpack.c.l.b16 %v140
    %v503 = vunpack.c.l.b16 %v141
    %v504 = vunpack.c.l.b16 %v142
    %v505 = vunpack.c.l.b16 %v143
    %v506 = vunpack.c.l.b16 %v144
    %v507 = vunpack.c.l.b16 %v145
    %v508 = vunpack.c.l.b16 %v146
    %v509 = vunpack.c.l.b16 %v147
    %v510 = vunpack.c.l.b16 %v148
    %v511 = vunpack.c.l.b16 %v149
    %v512 = vunpack.c.l.b16 %v150
    %v513 = vunpack.c.l.b16 %v151
    %v514 = vunpack.c.l.b16 %v152
    %v515 = vunpack.c.l.b16 %v153
    %v516 = vunpack.c.l.b16 %v154
    %v517 = vunpack.c.l.b16 %v155
    %v518 = vunpack.c.l.b16 %v156
    %v519 = vunpack.c.l.b16 %v157
    %v520 = vunpack.c.l.b16 %v158
    %v521 = vunpack.c.l.b16 %v159
    %v522 = vunpack.c.l.b16 %v160
    %v523 = vunpack.c.l.b16 %v161
    %v524 = vunpack.c.l.b16 %v162
    %v525 = vunpack.c.l.b16 %v163
    %v526 = vunpack.c.l.b16 %v164
    %v527 = vunpack.c.l.b16 %v165
    %v528 = vunpack.c.l.b16 %v166
    %v529 = vunpack.c.l.b16 %v167
    %v530 = vunpack.c.l.b16 %v168
    %v531 = vunpack.c.l.b16 %v169
    %v532 = vunpack.c.l.b16 %v170
    %v533 = vunpack.c.l.b16 %v171
    %v534 = vpack.c.b16 %v391, %v390
    %v535 = vpack.c.b16 %v393, %v392
    %v536 = vpack.c.b16 %v395, %v394
    %v537 = vpack.c.b16 %v397, %v396
    %v538 = vpack.c.b16 %v399, %v398
    %v539 = vpack.c.b16 %v401, %v400
    %v540 = vpack.c.b16 %v403, %v402
    %v541 = vpack.c.b16 %v405, %v404
    %v542 = vpack.c.b16 %v407, %v406
    %v543 = vpack.c.b16 %v409, %v408
    %v544 = vpack.c.b16 %v411, %v410
    %v545 = vpack.c.b16 %v413, %v412
    %v546 = vpack.c.b16 %v415, %v414
    %v547 = vpack.c.b16 %v417, %v416
    %v548 = vpack.c.b16 %v419, %v418
    %v549 = vpack.c.b16 %v421, %v420
    %v550 = vpack.c.b16 %v423, %v422
    %v551 = vpack.c.b16 %v425, %v424
    %v552 = vpack.c.b16 %v427, %v426
    %v553 = vpack.c.b16 %v429, %v428
    %v554 = vpack.c.b16 %v431, %v430
    %v555 = vpack.c.b16 %v433, %v432
    %v556 = vpack.c.b16 %v435, %v434
    %v557 = vpack.c.b16 %v437, %v436
    %v558 = vpack.c.b16 %v439, %v438
    %v559 = vpack.c.b16 %v441, %v440
    %v560 = vpack.c.b16 %v443, %v442
    %v561 = vpack.c.b16 %v445, %v444
    %v562 = vpack.c.b16 %v447, %v446
    %v563 = vpack.c.b16 %v449, %v448
    %v564 = vpack.c.b16 %v451, %v450
    %v565 = vpack.c.b16 %v453, %v452
    %v566 = vpack.c.b16 %v455, %v454
    %v567 = vpack.c.b16 %v457, %v456
    %v568 = vpack.c.b16 %v459, %v458
    %v569 = vpack.c.b16 %v461, %v460
    %v570 = vpack.c.b16 %v463, %v462
    %v571 = vpack.c.b16 %v465, %v464
    %v572 = vpack.c.b16 %v467, %v466
    %v573 = vpack.c.b16 %v469, %v468
    %v574 = vpack.c.b16 %v471, %v470
    %v575 = vpack.c.b16 %v473, %v472
    %v576 = vpack.c.b16 %v475, %v474
    %v577 = vpack.c.b16 %v477, %v476
    %v578 = vpack.c.b16 %v479, %v478
    %v579 = vpack.c.b16 %v481, %v480
    %v580 = vpack.c.b16 %v483, %v482
    %v581 = vpack.c.b16 %v485, %v484
    %v582 = vpack.c.b16 %v487, %v486
    %v583 = vpack.c.b16 %v489, %v488
    %v584 = vpack.c.b16 %v491, %v490
    %v585 = vpack.c.b16 %v493, %v492
    %v586 = vpack.c.b16 %v495, %v494
    %v587 = vpack.c.b16 %v497, %v496
    %v588 = vpack.c.b16 %v499, %v498
    %v589 = vpack.c.b16 %v501, %v500
    %v590 = vpack.c.b16 %v503, %v502
    %v591 = vpack.c.b16 %v505, %v504
    %v592 = vpack.c.b16 %v507, %v506
    %v593 = vpack.c.b16 %v509, %v508
    %v594 = vpack.c.b16 %v511, %v510
    %v595 = vpack.c.b16 %v513, %v512
    %v596 = vpack.c.b16 %v515, %v514
    %v597 = vpack.c.b16 %v517, %v516
    %v598 = vpack.c.b16 %v519, %v518
    %v599 = vpack.c.b16 %v521, %v520
    %v600 = vpack.c.b16 %v523, %v522
    %v601 = vpack.c.b16 %v525, %v524
    %v602 = vpack.c.b16 %v527, %v526
    %v603 = vpack.c.b16 %v529, %v528
    %v604 = vpack.c.b16 %v531, %v530
    %v605 = vpack.c.b16 %v533, %v532
    %678 = vmatprep.subr.bf16.mxu0 0
    %679 = vmatpush1.bf16.msra.mxu0 %v541
    %680 = vmatprep.subr.bf16.mxu0 0
    %681 = vmatpush1.bf16.msra.mxu0 %v540
    %682 = vmatprep.subr.bf16.mxu0 0
    %683 = vmatpush1.bf16.msra.mxu0 %v539
    %684 = vmatprep.subr.bf16.mxu0 0
    %685 = vmatpush1.bf16.msra.mxu0 %v538
    %686 = vmatprep.subr.bf16.mxu0 0
    %687 = vmatpush1.bf16.msra.mxu0 %v537
    %688 = vmatprep.subr.bf16.mxu0 0
    %689 = vmatpush1.bf16.msra.mxu0 %v536
    %690 = vmatprep.subr.bf16.mxu0 0
    %691 = vmatpush1.bf16.msra.mxu0 %v535
    %692 = vmatprep.subr.bf16.mxu0 0
    %693 = vmatpush1.bf16.msra.mxu0 %v534
    %694 = vmatprep.subr.bf16.mxu0 0
    %695 = vmatpush2.bf16.msra.mxu0 %v549
    %696 = vmatprep.subr.bf16.mxu0 0
    %697 = vmatpush2.bf16.msra.mxu0 %v548
    %698 = vmatprep.subr.bf16.mxu0 0
    %699 = vmatpush2.bf16.msra.mxu0 %v547
    %700 = vmatprep.subr.bf16.mxu0 0
    %701 = vmatpush2.bf16.msra.mxu0 %v546
    %702 = vmatprep.subr.bf16.mxu0 0
    %703 = vmatpush2.bf16.msra.mxu0 %v545
    %704 = vmatprep.subr.bf16.mxu0 0
    %705 = vmatpush2.bf16.msra.mxu0 %v544
    %706 = vmatprep.subr.bf16.mxu0 0
    %707 = vmatpush2.bf16.msra.mxu0 %v543
    %708 = vmatprep.subr.bf16.mxu0 0
    %709 = vmatpush2.bf16.msra.mxu0 %v542
    %710 = vmatprep.mubr.bf16.mxu0 %v211
    %711 = vmatmul.mubr.bf16.gmra.mxu0 %v197
    %v712 = vpop.f32.mrf.mxu0
    %v713 = vadd.f32 0.0, %v712
    %v714 = vpop.f32.mrf.mxu0
    %v715 = vpop.f32.mrf.mxu0
    %v716 = vpop.f32.mrf.mxu0
    %717 = vdwg.mxu0
    %718 = vmatprep.subr.bf16.mxu0 0
    %719 = vmatpush1.bf16.msra.mxu0 %v557
    %720 = vmatprep.subr.bf16.mxu0 0
    %721 = vmatpush1.bf16.msra.mxu0 %v556
    %722 = vmatprep.subr.bf16.mxu0 0
    %723 = vmatpush1.bf16.msra.mxu0 %v555
    %724 = vmatprep.subr.bf16.mxu0 0
    %725 = vmatpush1.bf16.msra.mxu0 %v554
    %726 = vmatprep.subr.bf16.mxu0 0
    %727 = vmatpush1.bf16.msra.mxu0 %v553
    %728 = vmatprep.subr.bf16.mxu0 0
    %729 = vmatpush1.bf16.msra.mxu0 %v552
    %730 = vmatprep.subr.bf16.mxu0 0
    %731 = vmatpush1.bf16.msra.mxu0 %v551
    %732 = vmatprep.subr.bf16.mxu0 0
    %733 = vmatpush1.bf16.msra.mxu0 %v550
    %734 = vmatprep.subr.bf16.mxu0 0
    %735 = vmatpush2.bf16.msra.mxu0 %v565
    %736 = vmatprep.subr.bf16.mxu0 0
    %737 = vmatpush2.bf16.msra.mxu0 %v564
    %738 = vmatprep.subr.bf16.mxu0 0
    %739 = vmatpush2.bf16.msra.mxu0 %v563
    %740 = vmatprep.subr.bf16.mxu0 0
    %741 = vmatpush2.bf16.msra.mxu0 %v562
    %742 = vmatprep.subr.bf16.mxu0 0
    %743 = vmatpush2.bf16.msra.mxu0 %v561
    %744 = vmatprep.subr.bf16.mxu0 0
    %745 = vmatpush2.bf16.msra.mxu0 %v560
    %746 = vmatprep.subr.bf16.mxu0 0
    %747 = vmatpush2.bf16.msra.mxu0 %v559
    %748 = vmatprep.subr.bf16.mxu0 0
    %749 = vmatpush2.bf16.msra.mxu0 %v558
    %750 = vmatprep.mubr.bf16.mxu0 %v221
    %751 = vmatmul.mubr.bf16.gmra.mxu0 %v219
    %v752 = vpop.f32.mrf.mxu0
    %v753 = vadd.f32 %v713, %v752
    %v754 = vpop.f32.mrf.mxu0
    %v755 = vpop.f32.mrf.mxu0
    %v756 = vpop.f32.mrf.mxu0
    %757 = vdwg.mxu0
    %758 = vmatprep.subr.bf16.mxu0 0
    %759 = vmatpush1.bf16.msra.mxu0 %v573
    %760 = vmatprep.subr.bf16.mxu0 0
    %761 = vmatpush1.bf16.msra.mxu0 %v572
    %762 = vmatprep.subr.bf16.mxu0 0
    %763 = vmatpush1.bf16.msra.mxu0 %v571
    %764 = vmatprep.subr.bf16.mxu0 0
    %765 = vmatpush1.bf16.msra.mxu0 %v570
    %766 = vmatprep.subr.bf16.mxu0 0
    %767 = vmatpush1.bf16.msra.mxu0 %v569
    %768 = vmatprep.subr.bf16.mxu0 0
    %769 = vmatpush1.bf16.msra.mxu0 %v568
    %770 = vmatprep.subr.bf16.mxu0 0
    %771 = vmatpush1.bf16.msra.mxu0 %v567
    %772 = vmatprep.subr.bf16.mxu0 0
    %773 = vmatpush1.bf16.msra.mxu0 %v566
    %774 = vmatprep.subr.bf16.mxu0 0
    %775 = vmatpush2.bf16.msra.mxu0 %v581
    %776 = vmatprep.subr.bf16.mxu0 0
    %777 = vmatpush2.bf16.msra.mxu0 %v580
    %778 = vmatprep.subr.bf16.mxu0 0
    %779 = vmatpush2.bf16.msra.mxu0 %v579
    %780 = vmatprep.subr.bf16.mxu0 0
    %781 = vmatpush2.bf16.msra.mxu0 %v578
    %782 = vmatprep.subr.bf16.mxu0 0
    %783 = vmatpush2.bf16.msra.mxu0 %v577
    %784 = vmatprep.subr.bf16.mxu0 0
    %785 = vmatpush2.bf16.msra.mxu0 %v576
    %786 = vmatprep.subr.bf16.mxu0 0
    %787 = vmatpush2.bf16.msra.mxu0 %v575
    %788 = vmatprep.subr.bf16.mxu0 0
    %789 = vmatpush2.bf16.msra.mxu0 %v574
    %790 = vmatprep.mubr.bf16.mxu0 %v218
    %791 = vmatmul.mubr.bf16.gmra.mxu0 %v204
    %v792 = vpop.f32.mrf.mxu0
    %v793 = vadd.f32 %v753, %v792
    %v794 = vpop.f32.mrf.mxu0
    %v795 = vpop.f32.mrf.mxu0
    %v796 = vpop.f32.mrf.mxu0
    %797 = vdwg.mxu0
    %798 = vmatprep.subr.bf16.mxu0 0
    %799 = vmatpush1.bf16.msra.mxu0 %v589
    %800 = vmatprep.subr.bf16.mxu0 0
    %801 = vmatpush1.bf16.msra.mxu0 %v588
    %802 = vmatprep.subr.bf16.mxu0 0
    %803 = vmatpush1.bf16.msra.mxu0 %v587
    %804 = vmatprep.subr.bf16.mxu0 0
    %805 = vmatpush1.bf16.msra.mxu0 %v586
    %806 = vmatprep.subr.bf16.mxu0 0
    %807 = vmatpush1.bf16.msra.mxu0 %v585
    %808 = vmatprep.subr.bf16.mxu0 0
    %809 = vmatpush1.bf16.msra.mxu0 %v584
    %810 = vmatprep.subr.bf16.mxu0 0
    %811 = vmatpush1.bf16.msra.mxu0 %v583
    %812 = vmatprep.subr.bf16.mxu0 0
    %813 = vmatpush1.bf16.msra.mxu0 %v582
    %814 = vmatprep.subr.bf16.mxu0 0
    %815 = vmatpush2.bf16.msra.mxu0 %v597
    %816 = vmatprep.subr.bf16.mxu0 0
    %817 = vmatpush2.bf16.msra.mxu0 %v596
    %818 = vmatprep.subr.bf16.mxu0 0
    %819 = vmatpush2.bf16.msra.mxu0 %v595
    %820 = vmatprep.subr.bf16.mxu0 0
    %821 = vmatpush2.bf16.msra.mxu0 %v594
    %822 = vmatprep.subr.bf16.mxu0 0
    %823 = vmatpush2.bf16.msra.mxu0 %v593
    %824 = vmatprep.subr.bf16.mxu0 0
    %825 = vmatpush2.bf16.msra.mxu0 %v592
    %826 = vmatprep.subr.bf16.mxu0 0
    %827 = vmatpush2.bf16.msra.mxu0 %v591
    %828 = vmatprep.subr.bf16.mxu0 0
    %829 = vmatpush2.bf16.msra.mxu0 %v590
    %830 = vmatprep.mubr.bf16.mxu0 %v222
    %831 = vmatmul.mubr.bf16.gmra.mxu0 %v220
    %v832 = vpop.f32.mrf.mxu0
    %v833 = vadd.f32 %v793, %v832
    %v834 = vpop.f32.mrf.mxu0
    %v835 = vpop.f32.mrf.mxu0
    %v836 = vpop.f32.mrf.mxu0
    %837 = vdwg.mxu0
    %838 = vmatprep.subr.bf16.mxu0 0
    %839 = vmatpush1.bf16.msra.mxu0 %v605
    %840 = vmatprep.subr.bf16.mxu0 0
    %841 = vmatpush1.bf16.msra.mxu0 %v604
    %842 = vmatprep.subr.bf16.mxu0 0
    %843 = vmatpush1.bf16.msra.mxu0 %v603
    %844 = vmatprep.subr.bf16.mxu0 0
    %845 = vmatpush1.bf16.msra.mxu0 %v602
    %846 = vmatprep.subr.bf16.mxu0 0
    %847 = vmatpush1.bf16.msra.mxu0 %v601
    %848 = vmatprep.subr.bf16.mxu0 0
    %849 = vmatpush1.bf16.msra.mxu0 %v600
    %850 = vmatprep.subr.bf16.mxu0 0
    %851 = vmatpush1.bf16.msra.mxu0 %v599
    %852 = vmatprep.subr.bf16.mxu0 0
    %853 = vmatpush1.bf16.msra.mxu0 %v598
    %854 = vmatprep.subr.bf16.mxu0 0
    %855 = vmatpush2.bf16.msra.mxu0 0
    %856 = vmatprep.subr.bf16.mxu0 0
    %857 = vmatpush2.bf16.msra.mxu0 0
    %858 = vmatprep.subr.bf16.mxu0 0
    %859 = vmatpush2.bf16.msra.mxu0 0
    %860 = vmatprep.subr.bf16.mxu0 0
    %861 = vmatpush2.bf16.msra.mxu0 0
    %862 = vmatprep.subr.bf16.mxu0 0
    %863 = vmatpush2.bf16.msra.mxu0 0
    %864 = vmatprep.subr.bf16.mxu0 0
    %865 = vmatpush2.bf16.msra.mxu0 0
    %866 = vmatprep.subr.bf16.mxu0 0
    %867 = vmatpush2.bf16.msra.mxu0 0
    %868 = vmatprep.subr.bf16.mxu0 0
    %869 = vmatpush2.bf16.msra.mxu0 0
    %870 = vmatprep.mubr.bf16.mxu0 0
    %871 = vmatmul.mubr.bf16.gmra.mxu0 %v236
    %v872 = vpop.f32.mrf.mxu0
    %v873 = vadd.f32 %v833, %v872
    %v874 = vpop.f32.mrf.mxu0
    %v875 = vpop.f32.mrf.mxu0
    %v876 = vpop.f32.mrf.mxu0
    %877 = vdwg.mxu0
    %v878 = vadd.f32 %v25, %v873
    %vm879 = vcmask 254976
    %880 = vst.msk [vmem:[#allocation2] sm:$0x3] %vm879, %v878
    // Predicated region
    $region22: #{tpu_custom_call.1} parent=1 // pred_check
      %p881 = pneg %p19
    $region23: #{tpu_custom_call.1} parent=1 // pred_check_branch
      %883 = sbr.rel (%p881) target = $region25
    $region24: #{tpu_custom_call.1} parent=1 // pred_region
      %v884 = vld [vmem:[%s2] sm:$0x1]
      %v885 = vld [vmem:[%s2 + $0x1] sm:$0x1]
      %v886 = vld [vmem:[%s2 + $0x2] sm:$0x1]
      %v887 = vld [vmem:[%s2 + $0x3] sm:$0x1]
      %v888 = vld [vmem:[#allocation2] sm:$0x3]
      %v889 = vlaneseq
      %v890 = vshrl.u32 %v889, 7
      %v891 = vsub.s32 0, %v890
      %v892 = vrot.slane %v884, %v891
      %v893 = vadd.f32 %v888, %v892
      %v894 = vmul.f32 %v893, 0.5
      %v895 = vmul.f32 %v893, 0.70710677
      %v896 = verf.f32.pop %v895
      %v897 = vadd.f32 %v896, 1.0
      %v898 = vmul.f32 %v894, %v897
      %v899 = vsel %vm879, %v898, 0.0
      %900 = vadd.xlane.f32.xlu0 %v899
      %v901 = vpop.xlane.xlu0 %900
      %v902 = vrcp.pop 32.0
      %v903 = vmul.f32 %v901, %v902
      %v904 = vsub.f32 %v898, %v903
      %v905 = vmul.f32 %v904, %v904
      %v906 = vsel %vm879, %v905, 0.0
      %907 = vadd.xlane.f32.xlu0 %v906
      %v908 = vpop.xlane.xlu0 %907
      %v909 = vmul.f32 %v908, %v902
      %v910 = vadd.f32 %v909, 1e-12
      %v911 = vrsqrt.pop %v910
      %v912 = vmul.f32 %v904, %v911
      %v913 = vlaneseq
      %v914 = vshrl.u32 %v913, 7
      %v915 = vsub.s32 0, %v914
      %v916 = vrot.slane %v885, %v915
      %v917 = vmul.f32 %v912, %v916
      %v918 = vlaneseq
      %v919 = vshrl.u32 %v918, 7
      %v920 = vsub.s32 0, %v919
      %v921 = vrot.slane %v886, %v920
      %v922 = vadd.f32 %v917, %v921
      %v923 = vpack.c.bf16 %v922, %v922
      %v924 = vld [vmem:[%s3] sm:$0xf]
      %v925 = vld [vmem:[%s3 + $0x4] sm:$0xf]
      %v926 = vld [vmem:[%s3 + $0x8] sm:$0xf]
      %v927 = vld [vmem:[%s3 + $0xc] sm:$0xf]
      %v928 = vlaneseq
      %v929 = vshrl.u32 %v928, 7
      %v930 = vsub.s32 0, %v929
      %v931 = vrot.slane %v887, %v930
      %v936 = vunpack.c.l.b16 %v924
      %v937 = vunpack.c.l.b16 %v925
      %v938 = vunpack.c.l.b16 %v926
      %v939 = vunpack.c.l.b16 %v927
      %v940 = vpack.c.b16 %v937, %v936
      %v941 = vpack.c.b16 %v939, %v938
      %vm944 = vcmask 261120
      %v946 = vsel %vm944, %v923, 0
      %948 = vmatprep.subr.bf16.mxu0 0
      %949 = vmatpush1.bf16.msra.mxu0 0
      %950 = vmatprep.subr.bf16.mxu0 0
      %951 = vmatpush1.bf16.msra.mxu0 0
      %952 = vmatprep.subr.bf16.mxu0 0
      %953 = vmatpush1.bf16.msra.mxu0 0
      %954 = vmatprep.subr.bf16.mxu0 0
      %955 = vmatpush1.bf16.msra.mxu0 0
      %956 = vmatprep.subr.bf16.mxu0 0
      %957 = vmatpush1.bf16.msra.mxu0 0
      %958 = vmatprep.subr.bf16.mxu0 0
      %959 = vmatpush1.bf16.msra.mxu0 0
      %960 = vmatprep.subr.bf16.mxu0 0
      %961 = vmatpush1.bf16.msra.mxu0 %v941
      %962 = vmatprep.subr.bf16.mxu0 0
      %963 = vmatpush1.bf16.msra.mxu0 %v940
      %964 = vmatprep.subr.bf16.mxu0 0
      %965 = vmatpush2.bf16.msra.mxu0 0
      %966 = vmatprep.subr.bf16.mxu0 0
      %967 = vmatpush2.bf16.msra.mxu0 0
      %968 = vmatprep.subr.bf16.mxu0 0
      %969 = vmatpush2.bf16.msra.mxu0 0
      %970 = vmatprep.subr.bf16.mxu0 0
      %971 = vmatpush2.bf16.msra.mxu0 0
      %972 = vmatprep.subr.bf16.mxu0 0
      %973 = vmatpush2.bf16.msra.mxu0 0
      %974 = vmatprep.subr.bf16.mxu0 0
      %975 = vmatpush2.bf16.msra.mxu0 0
      %976 = vmatprep.subr.bf16.mxu0 0
      %977 = vmatpush2.bf16.msra.mxu0 0
      %978 = vmatprep.subr.bf16.mxu0 0
      %979 = vmatpush2.bf16.msra.mxu0 0
      %980 = vmatprep.mubr.bf16.mxu0 0
      %981 = vmatmul.mubr.bf16.gmra.mxu0 %v946
      %v982 = vpop.f32.mrf.mxu0
      %v983 = vadd.f32 %v931, %v982
      %v984 = vpop.f32.mrf.mxu0
      %v985 = vpop.f32.mrf.mxu0
      %v986 = vpop.f32.mrf.mxu0
      %987 = vdwg.mxu0
      %988 = vst [vmem:[#allocation3] sm:$0x3] %v983
    $region25: #{tpu_custom_call.1} parent=1 // pred_fallthru
      _
    // Predicated region
    $region26: #{tpu_custom_call.1} parent=1 // pred_check
      _
    $region27: #{tpu_custom_call.1} parent=1 // pred_check_branch
      %990 = sbr.rel (0) target = $region29
    $region28: #{tpu_custom_call.1} parent=1 // pred_region
      %s992 = ssub.s32 32, 32
      %993 = vsyncadd [#allocation4], %s992
      %s995 = sshll.u32 [#allocation3], 4
      %s996 = int_to_ptr.vmem [resolvable:$true] %s995
      %998 = dma.vmem_to_hbm [thread:$0]  %s996, 32, %s4, [#allocation4]
    $region29: #{tpu_custom_call.1} parent=1 // pred_fallthru
      _
    // Predicated region
    $region30: #{tpu_custom_call.1} parent=1 // pred_check
      _
    $region31: #{tpu_custom_call.1} parent=1 // pred_check_branch
      %1000 = sbr.rel (0) target = $region33
    $region32: #{tpu_custom_call.1} parent=1 // pred_region
      %1001 = dma.done [#allocation4], 32
    $region33: #{tpu_custom_call.1} parent=1 // pred_fallthru
      _
    %1002 = vsyncpa [#allocation4], 1

</llo_original>
